<compile_context>
chip_gen: v5e
topology: v5e:2x2
jax: 0.10.0
libtpu: 0.0.40
codegen_flags: <defaults>
</compile_context>

<pallas_src>
import jax
import jax.numpy as jnp
from jax import lax
from jax.experimental import pallas as pl
from jax.experimental.pallas import tpu as pltpu


def _confnet_kernel(x_ref, w_ref, b_ref, o_ref):
    # x_ref: [TB, D] (streamed), w_ref: [A, D] (VMEM-resident),
    # b_ref: [1, A]  (VMEM-resident, f32), o_ref: [TB, A]
    acc = lax.dot_general(
        x_ref[...], w_ref[...],
        dimension_numbers=(((1,), (1,)), ((), ())),   # x @ w.T on the MXU
        preferred_element_type=jnp.float32,           # f32 accumulation
    )                                                 # [TB, A] f32
    o_ref[...] = (acc + b_ref[...]).astype(o_ref.dtype)


def _choose_batch_tile(B, batch_tile):
    """Pick the batch tile TB.

    - B <= batch_tile: single block equal to the full batch (legal block shape).
    - Otherwise: TB is a multiple of 8 (sublane alignment), <= batch_tile, and
      chosen so the grid has an even step count >= 4 — balanced 2-TC sharding
      on v7x, amortized per-step overhead everywhere.
    """
    if B <= batch_tile:
        return B
    steps = pl.cdiv(B, batch_tile)
    steps = max(steps, 4)
    if steps % 2:
        steps += 1
    tb = -(-B // steps)                 # ceil(B / steps)
    tb = ((tb + 7) // 8) * 8            # round up to a multiple of 8
    return min(tb, batch_tile)


def confnet_forward(x, weight, bias, *, batch_tile=4096, use_bf16=False,
                    min_pallas_batch=256):
    """ConfNet forward: out = x @ weight.T + bias (PyTorch nn.Linear semantics).

    x:      [B, D]
    weight: [A, D]   (PyTorch layout, used as-is)
    bias:   [A]
    returns [B, A] in x.dtype
    """
    B, D = x.shape
    A, D_w = weight.shape
    assert D == D_w, f"dim mismatch: x has D={D}, weight has D={D_w}"
    out_dtype = x.dtype

    # Tiny-batch fast path: pallas_call launch overhead dominates at small B.
    if B < min_pallas_batch:
        acc = jnp.dot(x, weight.T, preferred_element_type=jnp.float32)
        return (acc + bias.astype(jnp.float32)).astype(out_dtype)

    if use_bf16:
        # Halve the dominant HBM traffic (the x stream). Accumulation and the
        # bias add remain f32 inside the kernel.
        x = x.astype(jnp.bfloat16)
        weight = weight.astype(jnp.bfloat16)

    TB = _choose_batch_tile(B, batch_tile)
    b2 = bias.astype(jnp.float32).reshape(1, A)       # 2-D, f32, resident

    x_bytes = jnp.dtype(x.dtype).itemsize
    w_bytes = jnp.dtype(weight.dtype).itemsize
    o_bytes = jnp.dtype(out_dtype).itemsize

    return pl.pallas_call(
        _confnet_kernel,
        out_shape=jax.ShapeDtypeStruct((B, A), out_dtype),
        grid=(pl.cdiv(B, TB),),
        in_specs=[
            pl.BlockSpec((TB, D), lambda i: (i, 0)),   # x: streamed over batch
            pl.BlockSpec((A, D), lambda i: (0, 0)),    # weight: VMEM-resident
            pl.BlockSpec((1, A), lambda i: (0, 0)),    # bias:   VMEM-resident
        ],
        out_specs=pl.BlockSpec((TB, A), lambda i: (i, 0)),
        compiler_params=pltpu.CompilerParams(
            dimension_semantics=("parallel",),         # batch axis independent
        ),
        cost_estimate=pl.CostEstimate(
            flops=2 * B * D * A,
            bytes_accessed=(x_bytes * B * D + w_bytes * A * D
                            + 4 * A + o_bytes * B * A),
            transcendentals=0,
        ),
    )(x, weight, b2)


def _init_params(key, dim, annotators):
    # Deterministic init mimicking nn.Linear's uniform(-1/sqrt(dim), 1/sqrt(dim)).
    kw, kb = jax.random.split(key)
    bound = 1.0 / jnp.sqrt(jnp.float32(dim))
    weight = jax.random.uniform(kw, (annotators, dim), jnp.float32, -bound, bound)
    bias = jax.random.uniform(kb, (annotators,), jnp.float32, -bound, bound)
    return weight, bias


if __name__ == "__main__":
    key = jax.random.PRNGKey(0)
    k_x, k_p, k_x2 = jax.random.split(key, 3)

    dim, annotators = 32, 21
    weight, bias = _init_params(k_p, dim, annotators)

    # 1) Small batch, single-block kernel path (force past tiny-batch fallback).
    batch = 8
    x = jax.random.normal(k_x, (batch, dim), jnp.float32)
    out = jax.block_until_ready(
        confnet_forward(x, weight, bias, min_pallas_batch=0))
    ref = x @ weight.T + bias
    assert out.shape == (batch, annotators)
    assert jnp.allclose(out, ref, atol=1e-5, rtol=1e-5)

    # 2) Multi-step grid path: even-step-count heuristic + partial last tile.
    batch2 = 1040
    x2 = jax.random.normal(k_x2, (batch2, dim), jnp.float32)
    out2 = jax.block_until_ready(
        confnet_forward(x2, weight, bias, batch_tile=256))
    ref2 = x2 @ weight.T + bias
    assert out2.shape == (batch2, annotators)
    assert jnp.allclose(out2, ref2, atol=1e-5, rtol=1e-5)

    # 3) bf16 streaming path (f32 accumulation; looser tolerance for bf16 inputs).
    out3 = jax.block_until_ready(
        confnet_forward(x2, weight, bias, batch_tile=256, use_bf16=True))
    assert out3.shape == (batch2, annotators)
    assert out3.dtype == jnp.float32
    assert jnp.allclose(out3, ref2, atol=3e-2, rtol=3e-2)

    # 4) Tiny-batch fallback path (plain XLA matmul, no kernel launch).
    out4 = jax.block_until_ready(confnet_forward(x, weight, bias))
    assert jnp.allclose(out4, ref, atol=1e-5, rtol=1e-5)

    print("KERNEL_OK")
</pallas_src>

<mosaic_0001>
module attributes {stable_mosaic.version = 11 : i64} {
  func.func @_confnet_kernel(%arg0: i32, %arg1: memref<8x32xf32, #tpu.memory_space<vmem>>, %arg2: memref<21x32xf32, #tpu.memory_space<vmem>>, %arg3: memref<1x21xf32, #tpu.memory_space<vmem>>, %arg4: memref<8x21xf32, #tpu.memory_space<vmem>>) attributes {dimension_semantics = [#tpu.dimension_semantics<parallel>], iteration_bounds = array<i64: 1>, scalar_prefetch = 0 : i64, scratch_operands = 0 : i64, tpu.core_type = #tpu.core_type<tc>, window_params = [{transform_indices = @transform_0, window_bounds = array<i64: 8, 32>}, {pipeline_mode = #tpu.pipeline_mode<synchronous>, transform_indices = @transform_1, window_bounds = array<i64: 21, 32>}, {pipeline_mode = #tpu.pipeline_mode<synchronous>, transform_indices = @transform_2, window_bounds = array<i64: 1, 21>}, {transform_indices = @transform_3, window_bounds = array<i64: 8, 21>}]} {
    %c0 = arith.constant 0 : index
    %c0_0 = arith.constant 0 : index
    %0 = vector.load %arg1[%c0, %c0_0] : memref<8x32xf32, #tpu.memory_space<vmem>>, vector<8x32xf32>
    %c0_1 = arith.constant 0 : index
    %c0_2 = arith.constant 0 : index
    %1 = vector.load %arg2[%c0_1, %c0_2] : memref<21x32xf32, #tpu.memory_space<vmem>>, vector<21x32xf32>
    %cst = arith.constant dense<0.000000e+00> : vector<8x21xf32>
    %2 = tpu.matmul %0, %1, %cst {dimension_numbers = #tpu.dot_dimension_numbers<[1], [1], [0], [0], [0, 0, 1, 0], [], []>} : vector<8x32xf32>, vector<21x32xf32>, vector<8x21xf32> -> vector<8x21xf32>
    %c0_3 = arith.constant 0 : index
    %c0_4 = arith.constant 0 : index
    %3 = vector.load %arg3[%c0_3, %c0_4] : memref<1x21xf32, #tpu.memory_space<vmem>>, vector<1x21xf32>
    %4 = vector.broadcast %3 : vector<1x21xf32> to vector<8x21xf32>
    %5 = arith.addf %2, %4 : vector<8x21xf32>
    %c0_5 = arith.constant 0 : index
    %c0_6 = arith.constant 0 : index
    %6 = vector.load %arg4[%c0_5, %c0_6] : memref<8x21xf32, #tpu.memory_space<vmem>>, vector<8x21xf32>
    tpu.vector_store %arg4[%c0_5, %c0_6], %5 {strides = array<i32>} : memref<8x21xf32, #tpu.memory_space<vmem>>, vector<8x21xf32>,
    return
  }
  func.func @transform_0(%arg0: i32) -> (i32, i32) {
    %c0_i32 = arith.constant 0 : i32
    %c0_i32_0 = arith.constant 0 : i32
    return %arg0, %c0_i32 : i32, i32
  }
  func.func @transform_1(%arg0: i32) -> (i32, i32) {
    %c0_i32 = arith.constant 0 : i32
    %c0_i32_0 = arith.constant 0 : i32
    %c0_i32_1 = arith.constant 0 : i32
    return %c0_i32, %c0_i32_0 : i32, i32
  }
  func.func @transform_2(%arg0: i32) -> (i32, i32) {
    %c0_i32 = arith.constant 0 : i32
    %c0_i32_0 = arith.constant 0 : i32
    %c0_i32_1 = arith.constant 0 : i32
    return %c0_i32, %c0_i32_0 : i32, i32
  }
  func.func @transform_3(%arg0: i32) -> (i32, i32) {
    %c0_i32 = arith.constant 0 : i32
    %c0_i32_0 = arith.constant 0 : i32
    return %arg0, %c0_i32 : i32, i32
  }
}

</mosaic_0001>

<llo_original>
// kernel: tpu_custom_call.1
$region0: #{tpu_custom_call.1}
  #allocation0 [shape = 'u32[]', space=smem, size = 0x4, offset = 0x4, fixed_abs, tag = 'smem constant byte address 0x4 - core index']
  #allocation1 [shape = 'u32[72,128]{1,0:T(1,128)}', space=vmem, size = 0x9000, scoped, tag = 'internal scratch']
  %s0 = inlined_call_operand.hbm [shape: f32[8,32], index: 0, kind: input, shape index: {}]
  %s1 = inlined_call_operand.hbm [shape: f32[21,32], index: 1, kind: input, shape index: {}]
  %s2 = inlined_call_operand.vmem [shape: f32[1,21], index: 2, kind: input, shape index: {}]
  %s3 = inlined_call_operand.hbm [shape: f32[8,21], index: 3, kind: output, shape index: {}]
  %s4 = sld [smem:[#allocation0]]
  $region30: #{tpu_custom_call.1} parent=0
    _
  %s6 = ssub.s32 1, %s4
  %s7 = scalar_select 0, %s6, %s4
  $region1: #{tpu_custom_call.1} parent=0
    #allocation2 [shape = 'u8[4096]{0}', space=vmem, size = 0x1000, scoped, tag = 'input window, operand 0, single buffered']
    #allocation3 [shape = 's32[1]{0}', space=sflag, size = 0x4, scoped, tag = 'scoped memory for tpu_custom_call.1']
    #allocation4 [shape = 's32[1]{0}', space=sflag, size = 0x4, scoped, tag = 'scoped memory for tpu_custom_call.1']
    #allocation5 [shape = 'u8[12288]{0}', space=vmem, size = 0x3000, scoped, tag = 'input window, operand 1, single buffered']
    #allocation6 [shape = 's32[1]{0}', space=sflag, size = 0x4, scoped, tag = 'scoped memory for tpu_custom_call.1']
    #allocation7 [shape = 'u8[4096]{0}', space=vmem, size = 0x1000, scoped, tag = 'output window, operand 0, single buffered']
    %8 = vsyncpa [#allocation3], 0
    %9 = vsyncpa [#allocation6], 0
    %10 = vsyncpa [#allocation4], 0
    // Predicated region
    $region2: #{tpu_custom_call.1} parent=1 // pred_check
      _
    $region3: #{tpu_custom_call.1} parent=1 // pred_check_branch
      %12 = sbr.rel (0) target = $region5
    $region4: #{tpu_custom_call.1} parent=1 // pred_region
      %14 = vsyncadd [#allocation3], 0
      %s16 = sshll.u32 %s0, 4
      %s17 = int_to_ptr.hbm [resolvable:$true] %s16
      %s18 = sshll.u32 [#allocation2], 4
      %s19 = int_to_ptr.vmem [resolvable:$true] %s18
      %21 = dma.hbm_to_vmem [thread:$0]  %s17, 128, %s19, [#allocation3]
    $region5: #{tpu_custom_call.1} parent=1 // pred_fallthru
      _
    // Predicated region
    $region6: #{tpu_custom_call.1} parent=1 // pred_check
      _
    $region7: #{tpu_custom_call.1} parent=1 // pred_check_branch
      %23 = sbr.rel (0) target = $region9
    $region8: #{tpu_custom_call.1} parent=1 // pred_region
      %25 = vsyncadd [#allocation6], 0
      %s26 = sshll.u32 %s1, 4
      %s27 = int_to_ptr.hbm [resolvable:$true] %s26
      %s28 = sshll.u32 [#allocation5], 4
      %s29 = int_to_ptr.vmem [resolvable:$true] %s28
      %34 = dma.hbm_to_vmem [thread:$0]  %s27, 384, %s29, [#allocation6], 128, 128, 8
    $region9: #{tpu_custom_call.1} parent=1 // pred_fallthru
      _
    // Predicated region
    $region10: #{tpu_custom_call.1} parent=1 // pred_check
      _
    $region11: #{tpu_custom_call.1} parent=1 // pred_check_branch
      %36 = sbr.rel (0) target = $region13
    $region12: #{tpu_custom_call.1} parent=1 // pred_region
      _
    $region13: #{tpu_custom_call.1} parent=1 // pred_fallthru
      _
    // Predicated region
    $region14: #{tpu_custom_call.1} parent=1 // pred_check
      _
    $region15: #{tpu_custom_call.1} parent=1 // pred_check_branch
      %38 = sbr.rel (0) target = $region17
    $region16: #{tpu_custom_call.1} parent=1 // pred_region
      %40 = dma.done [#allocation3], 128
    $region17: #{tpu_custom_call.1} parent=1 // pred_fallthru
      _
    // Predicated region
    $region18: #{tpu_custom_call.1} parent=1 // pred_check
      _
    $region19: #{tpu_custom_call.1} parent=1 // pred_check_branch
      %42 = sbr.rel (0) target = $region21
    $region20: #{tpu_custom_call.1} parent=1 // pred_region
      %44 = dma.done [#allocation6], 384
    $region21: #{tpu_custom_call.1} parent=1 // pred_fallthru
      _
    %v45 = vld [vmem:[#allocation2] sm:$0xff]
    %v46 = vld [vmem:[#allocation5] sm:$0xff]
    %v47 = vld [vmem:[#allocation5 + $0x8] sm:$0xff]
    %v48 = vld [vmem:[#allocation5 + $0x10] sm:$0x1f]
    %v49 = vld [vmem:[%s2] sm:$0x1]
    %v51 = vperm.slane %v49, 0
    %vm53 = vcmask 261120
    %v55 = vsel %vm53, %v45, 0
    %v58 = vsel %vm53, %v46, 0
    %v61 = vsel %vm53, %v47, 0
    %v64 = vsel %vm53, %v48, 0
    %66 = vmatpush.xpose.msra.mxu0 0.0
    %67 = vmatpush.xpose.msra.mxu0 0.0
    %68 = vmatpush.xpose.msra.mxu0 0.0
    %69 = vmatpush.xpose.msra.mxu0 0.0
    %70 = vmatpush.xpose.msra.mxu0 0.0
    %71 = vmatpush.xpose.msra.mxu0 0.0
    %72 = vmatpush.xpose.msra.mxu0 0.0
    %73 = vmatpush.xpose.msra.mxu0 0.0
    %74 = vmatpush.xpose.msra.mxu0 0.0
    %75 = vmatpush.xpose.msra.mxu0 0.0
    %76 = vmatpush.xpose.msra.mxu0 0.0
    %77 = vmatpush.xpose.msra.mxu0 0.0
    %78 = vmatpush.xpose.msra.mxu0 0.0
    %79 = vmatpush.xpose.msra.mxu0 %v64
    %80 = vmatpush.xpose.msra.mxu0 %v61
    %81 = vmatpush.xpose.msra.mxu0 %v58
    %82 = vmatmul.f32.gmra.mxu0 %v55
    %v83 = vpop.f32.mrf.mxu0
    %v84 = vadd.f32 %v51, %v83
    %85 = vdwg.mxu0
    %vm86 = vcmask 171008
    %87 = vst.msk [vmem:[#allocation7] sm:$0xff] %vm86, %v84
    // Predicated region
    $region22: #{tpu_custom_call.1} parent=1 // pred_check
      _
    $region23: #{tpu_custom_call.1} parent=1 // pred_check_branch
      %89 = sbr.rel (0) target = $region25
    $region24: #{tpu_custom_call.1} parent=1 // pred_region
      %91 = vsyncadd [#allocation4], 0
      %s93 = sshll.u32 [#allocation7], 4
      %s94 = int_to_ptr.vmem [resolvable:$true] %s93
      %s95 = sshll.u32 %s3, 4
      %s96 = int_to_ptr.hbm [resolvable:$true] %s95
      %98 = dma.vmem_to_hbm [thread:$0]  %s94, 128, %s96, [#allocation4]
    $region25: #{tpu_custom_call.1} parent=1 // pred_fallthru
      _
    // Predicated region
    $region26: #{tpu_custom_call.1} parent=1 // pred_check
      _
    $region27: #{tpu_custom_call.1} parent=1 // pred_check_branch
      %100 = sbr.rel (0) target = $region29
    $region28: #{tpu_custom_call.1} parent=1 // pred_region
      %102 = dma.done [#allocation4], 128
    $region29: #{tpu_custom_call.1} parent=1 // pred_fallthru
      _
    %103 = vsyncpa [#allocation3], 1
    %104 = vsyncpa [#allocation6], 1
    %105 = vsyncpa [#allocation4], 1

</llo_original>
